<compile_context>
chip_gen: v5e
topology: v5e:2x2
jax: 0.10.0
libtpu: 0.0.40
codegen_flags: <defaults>
</compile_context>

<pallas_src>
import functools

import numpy as np
import jax
import jax.numpy as jnp
from jax.experimental import pallas as pl
from jax.experimental.pallas import tpu as pltpu

HIDDEN = 32
DTYPE = jnp.float32


# ----------------------------------------------------------------------------
# Fused Pallas kernel: both GateNN decomposers for the whole step, 2 MXU dots.
#   x_ref : (2*Npad, 4H)  rows [0:Npad] = l-batch, [Npad:2*Npad] = r-batch
#           lanes [0:3H] = [hidden | ctx | label], lanes [3H:4H] = left (or 0)
#   w_ref : (6H + 8, 4H)  rows [0:4H] = W1, [4H:6H] = W2, row 6H = b1, 6H+1 = b2
#   o_ref : (2*Npad, H)
# ----------------------------------------------------------------------------
def _decompose_step_kernel(x_ref, w_ref, o_ref):
    H = o_ref.shape[-1]
    n = o_ref.shape[0]           # 2 * Npad (static)
    half = n // 2                # Npad

    x = x_ref[...]                                   # (n, 4H)
    w1 = w_ref[0:4 * H, :]                           # (4H, 4H)
    w2 = w_ref[4 * H:6 * H, :]                       # (2H, 4H)
    b1 = w_ref[6 * H:6 * H + 1, :]                   # (1, 4H)
    b2 = w_ref[6 * H + 1:6 * H + 2, :]               # (1, 4H)

    def gate(z, lo):  # tanh-half * sigmoid-half starting at lane `lo`
        return jnp.tanh(z[:, lo:lo + H]) * jax.nn.sigmoid(z[:, lo + H:lo + 2 * H])

    is_l = jax.lax.broadcasted_iota(jnp.int32, (n, 1), 0) < half

    # Layer 1: one 128-lane dot covering both decomposers.
    z1 = jnp.dot(x, w1, preferred_element_type=jnp.float32) + b1
    h = jnp.where(is_l, gate(z1, 0), gate(z1, 2 * H))          # (n, H)

    # Layer 2: input is [h | left]; l-columns of w2 ignore the left rows.
    x2 = jnp.concatenate([h, x[:, 3 * H:4 * H]], axis=-1)       # (n, 2H)
    z2 = jnp.dot(x2, w2, preferred_element_type=jnp.float32) + b2
    o_ref[...] = jnp.where(is_l, gate(z2, 0), gate(z2, 2 * H)).astype(o_ref.dtype)


@jax.jit
def _decompose_step(w_slab, rows, dest):
    """One fused launch for a whole decode step.

    rows : (7*Npad, H) = [l_hid | l_ctx | l_lab | r_hid | r_ctx | r_lab | r_left]
    dest : (2*Npad,) int32 batch index per kernel row (Npad == drop)
    returns children : (Npad, H), zeros (= pad_hidden) where nothing computed.
    """
    H = HIDDEN
    npad = rows.shape[0] // 7
    r = rows.reshape(7, npad, H)
    zeros = jnp.zeros((npad, H), DTYPE)
    x_l = jnp.concatenate([r[0], r[1], r[2], zeros], axis=-1)   # (Npad, 4H)
    x_r = jnp.concatenate([r[3], r[4], r[5], r[6]], axis=-1)    # (Npad, 4H)
    x = jnp.concatenate([x_l, x_r], axis=0)                     # (2*Npad, 4H)

    n = 2 * npad
    cost = pl.CostEstimate(
        flops=2 * n * (4 * H * 4 * H + 2 * H * 4 * H),
        transcendentals=n * 8 * H,
        bytes_accessed=(x.size + w_slab.size + n * H) * 4,
    )
    vmem = pl.BlockSpec(memory_space=pltpu.MemorySpace.VMEM)
    out = pl.pallas_call(
        _decompose_step_kernel,
        out_shape=jax.ShapeDtypeStruct((n, H), DTYPE),
        in_specs=[vmem, vmem],
        out_specs=vmem,
        cost_estimate=cost,
    )(x, w_slab)

    # Scatter kernel rows back to batch order; unused rows drop, pad rows stay 0.
    children = jnp.zeros((npad, H), DTYPE).at[dest].set(out, mode="drop")
    return children


# ----------------------------------------------------------------------------
# Parameters: per-path fused (in, 2H) matrices (PyTorch-equivalent), plus a
# one-time packer into the single resident weight slab used by the kernel.
# ----------------------------------------------------------------------------
def init_params(key, H=HIDDEN):
    ks = jax.random.split(key, 8)
    s = 0.1

    def mat(k, i, o):
        return (s * jax.random.normal(k, (i, o))).astype(DTYPE)

    def vec(k, o):
        return (s * jax.random.normal(k, (o,))).astype(DTYPE)

    # columns [0:H] = tanh (hidden_l*) half, [H:2H] = sigmoid (gate_l*) half
    l = dict(w1=mat(ks[0], 3 * H, 2 * H), b1=vec(ks[1], 2 * H),
             w2=mat(ks[2], H, 2 * H), b2=vec(ks[3], 2 * H))
    r = dict(w1=mat(ks[4], 3 * H, 2 * H), b1=vec(ks[5], 2 * H),
             w2=mat(ks[6], 2 * H, 2 * H), b2=vec(ks[7], 2 * H))
    return {"l": l, "r": r}


def pack_weight_slab(params, H=HIDDEN):
    """Pack every weight/bias of both paths into one (6H+8, 4H) f32 slab."""
    l, r = params["l"], params["r"]
    w1 = jnp.zeros((4 * H, 4 * H), DTYPE)
    w1 = w1.at[:3 * H, :2 * H].set(l["w1"]).at[:3 * H, 2 * H:].set(r["w1"])
    w2 = jnp.zeros((2 * H, 4 * H), DTYPE)
    w2 = w2.at[:H, :2 * H].set(l["w2"]).at[:, 2 * H:].set(r["w2"])
    b1 = jnp.concatenate([l["b1"], r["b1"]])[None, :]
    b2 = jnp.concatenate([l["b2"], r["b2"]])[None, :]
    pad = jnp.zeros((6, 4 * H), DTYPE)           # round rows up to multiple of 8
    return jnp.concatenate([w1, w2, b1, b2, pad], axis=0)    # (200, 128)


# ----------------------------------------------------------------------------
# DecomposeModel forward: stack bookkeeping in Python, compute in ONE fused
# Pallas launch per step, scatter/pad handled under the same jit.
# ----------------------------------------------------------------------------
class NodeEmbeddingNode:
    def __init__(self, node_hidden, node_context=None, label_embedding=None):
        self.node_hidden = node_hidden
        self.node_context = node_context
        self.label_embedding = label_embedding


class TreeNode:
    def __init__(self, embedding, terminal):
        self.embedding = embedding
        self.terminal = terminal


@functools.lru_cache(maxsize=1)
def _zero_row():
    return jnp.zeros((HIDDEN,), DTYPE)


def decompose_forward(w_slab, node_stacks, tree_stacks, nodes_context,
                      labels_embedding, pad_node=True):
    # TODO(synk): the data-dependent tree/stack mutation is inherently
    # host-side Python; only the GateNN math runs on TPU.
    n = len(node_stacks)
    npad = max(8, ((n + 7) // 8) * 8)   # fixed bucket -> one compile per batch size
    zero = _zero_row()

    l_idx, l_hid, l_ctx, l_lab = [], [], [], []
    r_idx, r_hid, r_ctx, r_lab, r_left = [], [], [], [], []

    # Phase 1 (host): classify every batch element, gather its row inputs.
    for i, (node_stack, tree_stack, node_context, label_embedding) in enumerate(
            zip(node_stacks, tree_stacks, nodes_context, labels_embedding)):
        if len(node_stack) > 0:
            if not tree_stack[-1].terminal:
                node_hidden = node_stack[-1].node_hidden
                node_stack[-1] = NodeEmbeddingNode(node_hidden, node_context,
                                                   label_embedding)
                l_idx.append(i)
                l_hid.append(node_hidden)
                l_ctx.append(node_context)
                l_lab.append(label_embedding)
            else:
                node_stack.pop()
                if len(node_stack) > 0:
                    parent = node_stack.pop()
                    r_idx.append(i)
                    r_hid.append(parent.node_hidden)
                    r_ctx.append(parent.node_context)
                    r_lab.append(parent.label_embedding)
                    r_left.append(tree_stack[-1].embedding)

    # Phase 2 (device): one row-slab stack + one fused Pallas launch.
    if l_idx or r_idx:
        def padded(lst):
            return lst + [zero] * (npad - len(lst))

        rows = jnp.stack(
            padded(l_hid) + padded(l_ctx) + padded(l_lab) +
            padded(r_hid) + padded(r_ctx) + padded(r_lab) + padded(r_left),
            axis=0)                                          # (7*npad, H)
        dest_np = np.full((2 * npad,), npad, dtype=np.int32)  # npad -> dropped
        for j, i in enumerate(l_idx):
            dest_np[j] = i
        for j, i in enumerate(r_idx):
            dest_np[npad + j] = i
        children = _decompose_step(w_slab, rows, jnp.asarray(dest_np))
    else:
        children = jnp.zeros((npad, HIDDEN), DTYPE)

    # Phase 3 (host): stack bookkeeping; untouched rows of `children` are the
    # pad hidden (zeros), matching the original module.
    for i in l_idx:
        node_stacks[i].append(NodeEmbeddingNode(children[i], None, None))
    for i in r_idx:
        node_stacks[i].append(NodeEmbeddingNode(children[i], None, None))
    if pad_node:
        for i in range(n):
            if len(node_stacks[i]) == 0:
                node_stacks[i].append(NodeEmbeddingNode(zero, None, None))

    return children[:n]


# ----------------------------------------------------------------------------
# Pure-JAX reference of the GateNN compute (eval mode), for correctness checks.
# ----------------------------------------------------------------------------
def _ref_gate(p, hidden, ctx, lab, left=None):
    H = HIDDEN
    x1 = jnp.concatenate([hidden, ctx, lab], axis=-1)
    z1 = x1 @ p["w1"] + p["b1"]
    h = jnp.tanh(z1[:, :H]) * jax.nn.sigmoid(z1[:, H:])
    x2 = h if left is None else jnp.concatenate([h, left], axis=-1)
    z2 = x2 @ p["w2"] + p["b2"]
    return jnp.tanh(z2[:, :H]) * jax.nn.sigmoid(z2[:, H:])


if __name__ == "__main__":
    H = HIDDEN
    key = jax.random.PRNGKey(0)
    kp, kd = jax.random.split(key)
    params = init_params(kp, H)
    w_slab = pack_weight_slab(params, H)

    # Batch of 4 tree states covering every branch:
    #   0 -> non-terminal top                       -> l_decompose path
    #   1 -> terminal top with a parent below       -> r_decompose path
    #   2 -> terminal top, stack empties after pop  -> pad path
    #   3 -> empty node stack                       -> pad path
    dks = jax.random.split(kd, 12)

    def v(k):
        return jax.random.normal(k, (H,)).astype(DTYPE)

    nodes_context = [v(dks[0]), v(dks[1]), v(dks[2]), v(dks[3])]
    labels_embedding = [v(dks[4]), v(dks[5]), v(dks[6]), v(dks[7])]

    parent_ctx = v(dks[8])     # stored on the parent (must be used, not the
    parent_lab = v(dks[9])     # current step's context/label)
    parent_hid = v(dks[10])
    top_hid = v(dks[11])

    node_stacks = [
        [NodeEmbeddingNode(v(dks[8]))],
        [NodeEmbeddingNode(parent_hid, parent_ctx, parent_lab),
         NodeEmbeddingNode(top_hid)],
        [NodeEmbeddingNode(v(dks[9]))],
        [],
    ]
    tree_stacks = [
        [TreeNode(v(dks[0]), terminal=False)],
        [TreeNode(v(dks[5]), terminal=True)],
        [TreeNode(v(dks[6]), terminal=True)],
        [TreeNode(v(dks[7]), terminal=False)],
    ]

    # Keep copies needed for the reference check (the forward mutates stacks).
    nh0 = node_stacks[0][-1].node_hidden
    left1 = tree_stacks[1][-1].embedding

    out = decompose_forward(w_slab, node_stacks, tree_stacks,
                            nodes_context, labels_embedding, pad_node=True)
    out = jax.block_until_ready(out)
    assert out.shape == (4, H) and out.dtype == DTYPE

    # Reference check of the Pallas-computed rows.
    ref0 = _ref_gate(params["l"], nh0[None, :], nodes_context[0][None, :],
                     labels_embedding[0][None, :])[0]
    ref1 = _ref_gate(params["r"], parent_hid[None, :], parent_ctx[None, :],
                     parent_lab[None, :], left1[None, :])[0]
    ref2 = jnp.zeros((H,), DTYPE)
    ref3 = jnp.zeros((H,), DTYPE)
    ref = jnp.stack([ref0, ref1, ref2, ref3], axis=0)
    assert jnp.allclose(out, ref, atol=1e-5, rtol=1e-5)

    # Stack bookkeeping sanity.
    assert len(node_stacks[0]) == 2          # replaced parent + new child
    assert len(node_stacks[1]) == 1          # popped twice, child appended
    assert len(node_stacks[2]) == 1          # emptied -> pad node appended
    assert len(node_stacks[3]) == 1          # empty -> pad node appended

    # Second call with the mutated stacks: same shapes -> no recompile.
    out2 = decompose_forward(w_slab, node_stacks, tree_stacks,
                             nodes_context, labels_embedding, pad_node=True)
    jax.block_until_ready(out2)

    print("KERNEL_OK")
</pallas_src>

<mosaic_0001>
module attributes {stable_mosaic.version = 11 : i64} {
  func.func @_decompose_step_kernel(%arg0: memref<16x128xf32, #tpu.memory_space<vmem>>, %arg1: memref<200x128xf32, #tpu.memory_space<vmem>>, %arg2: memref<16x32xf32, #tpu.memory_space<vmem>>) attributes {dimension_semantics = [], scalar_prefetch = 0 : i64, scratch_operands = 0 : i64, tpu.core_type = #tpu.core_type<tc>} {
    %c0 = arith.constant 0 : index
    %c0_0 = arith.constant 0 : index
    %0 = vector.load %arg0[%c0, %c0_0] : memref<16x128xf32, #tpu.memory_space<vmem>>, vector<16x128xf32>
    %c0_1 = arith.constant 0 : index
    %c0_2 = arith.constant 0 : index
    %1 = vector.load %arg1[%c0_1, %c0_2] : memref<200x128xf32, #tpu.memory_space<vmem>>, vector<128x128xf32>
    %c128 = arith.constant 128 : index
    %c0_3 = arith.constant 0 : index
    %2 = vector.load %arg1[%c128, %c0_3] : memref<200x128xf32, #tpu.memory_space<vmem>>, vector<64x128xf32>
    %c192 = arith.constant 192 : index
    %c0_4 = arith.constant 0 : index
    %3 = vector.load %arg1[%c192, %c0_4] : memref<200x128xf32, #tpu.memory_space<vmem>>, vector<1x128xf32>
    %c193 = arith.constant 193 : index
    %c0_5 = arith.constant 0 : index
    %4 = vector.load %arg1[%c193, %c0_5] : memref<200x128xf32, #tpu.memory_space<vmem>>, vector<1x128xf32>
    %5 = tpu.iota {dimensions = array<i32: 0>} : vector<16x1xi32>
    %c8_i32 = arith.constant 8 : i32
    %6 = vector.broadcast %c8_i32 : i32 to vector<16x1xi32>
    %7 = arith.cmpi slt, %5, %6 : vector<16x1xi32>
    %cst = arith.constant dense<0.000000e+00> : vector<16x128xf32>
    %8 = tpu.matmul %0, %1, %cst {dimension_numbers = #tpu.dot_dimension_numbers<[1], [0], [0], [1], [0, 0, 1, 1], [], []>} : vector<16x128xf32>, vector<128x128xf32>, vector<16x128xf32> -> vector<16x128xf32>
    %9 = vector.broadcast %3 : vector<1x128xf32> to vector<16x128xf32>
    %10 = arith.addf %8, %9 : vector<16x128xf32>
    %11 = vector.extract_strided_slice %10 {offsets = [0, 0], sizes = [16, 32], strides = [1, 1]} : vector<16x128xf32> to vector<16x32xf32>
    %12 = math.tanh %11 : vector<16x32xf32>
    %13 = vector.extract_strided_slice %10 {offsets = [0, 32], sizes = [16, 32], strides = [1, 1]} : vector<16x128xf32> to vector<16x32xf32>
    %14 = arith.negf %13 : vector<16x32xf32>
    %15 = math.exp %14 : vector<16x32xf32>
    %cst_6 = arith.constant 1.000000e+00 : f32
    %16 = vector.broadcast %cst_6 : f32 to vector<16x32xf32>
    %17 = arith.addf %16, %15 : vector<16x32xf32>
    %18 = arith.divf %16, %17 : vector<16x32xf32>
    %19 = arith.mulf %12, %18 : vector<16x32xf32>
    %20 = vector.extract_strided_slice %10 {offsets = [0, 64], sizes = [16, 32], strides = [1, 1]} : vector<16x128xf32> to vector<16x32xf32>
    %21 = math.tanh %20 : vector<16x32xf32>
    %22 = vector.extract_strided_slice %10 {offsets = [0, 96], sizes = [16, 32], strides = [1, 1]} : vector<16x128xf32> to vector<16x32xf32>
    %23 = arith.negf %22 : vector<16x32xf32>
    %24 = math.exp %23 : vector<16x32xf32>
    %cst_7 = arith.constant 1.000000e+00 : f32
    %25 = vector.broadcast %cst_7 : f32 to vector<16x32xf32>
    %26 = arith.addf %25, %24 : vector<16x32xf32>
    %27 = arith.divf %25, %26 : vector<16x32xf32>
    %28 = arith.mulf %21, %27 : vector<16x32xf32>
    %29 = vector.shape_cast %7 : vector<16x1xi1> to vector<16x1xi1>
    %30 = vector.broadcast %29 : vector<16x1xi1> to vector<16x32xi1>
    %31 = arith.select %30, %19, %28 : vector<16x32xi1>, vector<16x32xf32>
    %32 = vector.extract_strided_slice %0 {offsets = [0, 96], sizes = [16, 32], strides = [1, 1]} : vector<16x128xf32> to vector<16x32xf32>
    %33 = tpu.concatenate %31, %32 in 1 : vector<16x32xf32>, vector<16x32xf32> -> vector<16x64xf32>
    %cst_8 = arith.constant dense<0.000000e+00> : vector<16x128xf32>
    %34 = tpu.matmul %33, %2, %cst_8 {dimension_numbers = #tpu.dot_dimension_numbers<[1], [0], [0], [1], [0, 0, 1, 1], [], []>} : vector<16x64xf32>, vector<64x128xf32>, vector<16x128xf32> -> vector<16x128xf32>
    %35 = vector.broadcast %4 : vector<1x128xf32> to vector<16x128xf32>
    %36 = arith.addf %34, %35 : vector<16x128xf32>
    %37 = vector.extract_strided_slice %36 {offsets = [0, 0], sizes = [16, 32], strides = [1, 1]} : vector<16x128xf32> to vector<16x32xf32>
    %38 = math.tanh %37 : vector<16x32xf32>
    %39 = vector.extract_strided_slice %36 {offsets = [0, 32], sizes = [16, 32], strides = [1, 1]} : vector<16x128xf32> to vector<16x32xf32>
    %40 = arith.negf %39 : vector<16x32xf32>
    %41 = math.exp %40 : vector<16x32xf32>
    %cst_9 = arith.constant 1.000000e+00 : f32
    %42 = vector.broadcast %cst_9 : f32 to vector<16x32xf32>
    %43 = arith.addf %42, %41 : vector<16x32xf32>
    %44 = arith.divf %42, %43 : vector<16x32xf32>
    %45 = arith.mulf %38, %44 : vector<16x32xf32>
    %46 = vector.extract_strided_slice %36 {offsets = [0, 64], sizes = [16, 32], strides = [1, 1]} : vector<16x128xf32> to vector<16x32xf32>
    %47 = math.tanh %46 : vector<16x32xf32>
    %48 = vector.extract_strided_slice %36 {offsets = [0, 96], sizes = [16, 32], strides = [1, 1]} : vector<16x128xf32> to vector<16x32xf32>
    %49 = arith.negf %48 : vector<16x32xf32>
    %50 = math.exp %49 : vector<16x32xf32>
    %cst_10 = arith.constant 1.000000e+00 : f32
    %51 = vector.broadcast %cst_10 : f32 to vector<16x32xf32>
    %52 = arith.addf %51, %50 : vector<16x32xf32>
    %53 = arith.divf %51, %52 : vector<16x32xf32>
    %54 = arith.mulf %47, %53 : vector<16x32xf32>
    %55 = vector.shape_cast %7 : vector<16x1xi1> to vector<16x1xi1>
    %56 = vector.broadcast %55 : vector<16x1xi1> to vector<16x32xi1>
    %57 = arith.select %56, %45, %54 : vector<16x32xi1>, vector<16x32xf32>
    %c0_11 = arith.constant 0 : index
    %c0_12 = arith.constant 0 : index
    %58 = vector.load %arg2[%c0_11, %c0_12] : memref<16x32xf32, #tpu.memory_space<vmem>>, vector<16x32xf32>
    tpu.vector_store %arg2[%c0_11, %c0_12], %57 {strides = array<i32>} : memref<16x32xf32, #tpu.memory_space<vmem>>, vector<16x32xf32>,
    return
  }
}

</mosaic_0001>

<llo_original>
// kernel: _decompose_step.1
$region0: #{_decompose_step.1}
  #allocation0 [shape = 'u32[]', space=smem, size = 0x4, offset = 0x4, fixed_abs, tag = 'smem constant byte address 0x4 - core index']
  #allocation1 [shape = 'u32[72,128]{1,0:T(1,128)}', space=vmem, size = 0x9000, scoped, tag = 'internal scratch']
  %s0 = inlined_call_operand.vmem [shape: f32[16,128], index: 0, kind: input, shape index: {}]
  %s1 = inlined_call_operand.vmem [shape: f32[200,128], index: 1, kind: input, shape index: {}]
  %s2 = inlined_call_operand.vmem [shape: f32[16,32], index: 2, kind: output, shape index: {}]
  %s3 = sld [smem:[#allocation0]]
  $region18: #{_decompose_step.1} parent=0
    _
  %s5 = ssub.s32 1, %s3
  %s6 = scalar_select 0, %s5, %s3
  // Predicated region
  $region2: #{_decompose_step.1} parent=0 // pred_check
    _
  $region3: #{_decompose_step.1} parent=0 // pred_check_branch
    %8 = sbr.rel (0) target = $region5
  $region4: #{_decompose_step.1} parent=0 // pred_region
    _
  $region5: #{_decompose_step.1} parent=0 // pred_fallthru
    _
  // Predicated region
  $region6: #{_decompose_step.1} parent=0 // pred_check
    _
  $region7: #{_decompose_step.1} parent=0 // pred_check_branch
    %10 = sbr.rel (0) target = $region9
  $region8: #{_decompose_step.1} parent=0 // pred_region
    _
  $region9: #{_decompose_step.1} parent=0 // pred_fallthru
    _
  %v11 = vld [vmem:[%s0] sm:$0xff]
  %v12 = vld [vmem:[%s0 + $0x8] sm:$0xff]
  %v13 = vld [vmem:[%s1] sm:$0xff]
  %v14 = vld [vmem:[%s1 + $0x8] sm:$0xff]
  %v15 = vld [vmem:[%s1 + $0x10] sm:$0xff]
  %v16 = vld [vmem:[%s1 + $0x18] sm:$0xff]
  %v17 = vld [vmem:[%s1 + $0x20] sm:$0xff]
  %v18 = vld [vmem:[%s1 + $0x28] sm:$0xff]
  %v19 = vld [vmem:[%s1 + $0x30] sm:$0xff]
  %v20 = vld [vmem:[%s1 + $0x38] sm:$0xff]
  %v21 = vld [vmem:[%s1 + $0x40] sm:$0xff]
  %v22 = vld [vmem:[%s1 + $0x48] sm:$0xff]
  %v23 = vld [vmem:[%s1 + $0x50] sm:$0xff]
  %v24 = vld [vmem:[%s1 + $0x58] sm:$0xff]
  %v25 = vld [vmem:[%s1 + $0x60] sm:$0xff]
  %v26 = vld [vmem:[%s1 + $0x68] sm:$0xff]
  %v27 = vld [vmem:[%s1 + $0x70] sm:$0xff]
  %v28 = vld [vmem:[%s1 + $0x78] sm:$0xff]
  %v29 = vld [vmem:[%s1 + $0x80] sm:$0xff]
  %v30 = vld [vmem:[%s1 + $0x88] sm:$0xff]
  %v31 = vld [vmem:[%s1 + $0x90] sm:$0xff]
  %v32 = vld [vmem:[%s1 + $0x98] sm:$0xff]
  %v33 = vld [vmem:[%s1 + $0xa0] sm:$0xff]
  %v34 = vld [vmem:[%s1 + $0xa8] sm:$0xff]
  %v35 = vld [vmem:[%s1 + $0xb0] sm:$0xff]
  %v36 = vld [vmem:[%s1 + $0xb8] sm:$0xff]
  %v37 = vld [vmem:[%s1 + $0xc0] sm:$0x1]
  %v38 = vld [vmem:[%s1 + $0xc1] sm:$0x1]
  %v39 = vlaneseq
  %v40 = vshrl.u32 %v39, 7
  %v41 = vadd.s32 %v40, 8
  %vm42 = vcmp.lt.s32.totalorder %v40, 8
  %vm43 = vcmp.lt.s32.totalorder %v41, 8
  %v44 = vperm.slane %v37, 0
  %45 = vmatpush.msra.mxu0 %v28
  %46 = vmatpush.msra.mxu0 %v27
  %47 = vmatpush.msra.mxu0 %v26
  %48 = vmatpush.msra.mxu0 %v25
  %49 = vmatpush.msra.mxu0 %v24
  %50 = vmatpush.msra.mxu0 %v23
  %51 = vmatpush.msra.mxu0 %v22
  %52 = vmatpush.msra.mxu0 %v21
  %53 = vmatpush.msra.mxu0 %v20
  %54 = vmatpush.msra.mxu0 %v19
  %55 = vmatpush.msra.mxu0 %v18
  %56 = vmatpush.msra.mxu0 %v17
  %57 = vmatpush.msra.mxu0 %v16
  %58 = vmatpush.msra.mxu0 %v15
  %59 = vmatpush.msra.mxu0 %v14
  %60 = vmatpush.msra.mxu0 %v13
  %61 = vmatmul.f32.gmra.mxu0 %v11
  %v62 = vpop.f32.mrf.mxu0
  %v63 = vadd.f32 %v44, %v62
  %64 = vmatmul.f32.gmra.mxu0 %v12
  %v65 = vpop.f32.mrf.mxu0
  %v66 = vadd.f32 %v44, %v65
  %67 = vdwg.mxu0
  %v68 = vtanh.pop %v63
  %v69 = vtanh.pop %v66
  %v70 = vxor.u32 %v63, 2147483648
  %v71 = vxor.u32 %v66, 2147483648
  %v72 = vmul.f32 %v70, 1.442695
  %v73 = vpow.pop %v72
  %v74 = vmul.f32 %v71, 1.442695
  %v75 = vpow.pop %v74
  %v76 = vadd.f32 %v73, 1.0
  %v77 = vadd.f32 %v75, 1.0
  %v78 = vrcp.pop %v76
  %v79 = vmul.f32 %v76, %v78
  %v80 = vsub.f32 1.0, %v79
  %v81 = vmul.f32 %v78, %v80
  %v82 = vadd.f32 %v78, %v81
  %vm83 = vweird.f32 %v76
  %vm84 = vweird.f32 %v78
  %vm85 = vmor %vm83, %vm84
  %v86 = vsel %vm85, %v78, %v82
  %v87 = vand.u32 2147483647, %v76
  %vm88 = vcmp.eq.f32.partialorder %v87, 8.507059e+37
  %v89 = vand.u32 %v76, 2147483648
  %v90 = vor.u32 1.1754944e-38, %v89
  %v91 = vsel %vm88, %v90, %v86
  %v92 = vmul.f32 1.0, %v91
  %v93 = vrcp.pop %v77
  %v94 = vmul.f32 %v77, %v93
  %v95 = vsub.f32 1.0, %v94
  %v96 = vmul.f32 %v93, %v95
  %v97 = vadd.f32 %v93, %v96
  %vm98 = vweird.f32 %v77
  %vm99 = vweird.f32 %v93
  %vm100 = vmor %vm98, %vm99
  %v101 = vsel %vm100, %v93, %v97
  %v102 = vand.u32 2147483647, %v77
  %vm103 = vcmp.eq.f32.partialorder %v102, 8.507059e+37
  %v104 = vand.u32 %v77, 2147483648
  %v105 = vor.u32 1.1754944e-38, %v104
  %v106 = vsel %vm103, %v105, %v101
  %v107 = vmul.f32 1.0, %v106
  %110 = vrot.lane.b32.xlu0 %v92, 96
  %v111 = vpop.permute.xlu0 %110
  %112 = vrot.lane.b32.xlu0 %v107, 96
  %v113 = vpop.permute.xlu0 %112
  %v116 = vmul.f32 %v68, %v111
  %v117 = vmul.f32 %v69, %v113
  %v118 = vsel %vm42, 1, 0
  %v119 = vsel %vm43, 1, 0
  %vm120 = vcmp.eq.s32.totalorder %v118, 1
  %vm121 = vcmp.eq.s32.totalorder %v119, 1
  %124 = vrot.lane.b32.xlu0 %v116, 64
  %v125 = vpop.permute.xlu0 %124
  %126 = vrot.lane.b32.xlu0 %v117, 64
  %v127 = vpop.permute.xlu0 %126
  %v130 = vsel %vm120, %v116, %v125
  %v131 = vsel %vm121, %v117, %v127
  %134 = vrot.lane.b32.xlu0 %v11, 64
  %v135 = vpop.permute.xlu0 %134
  %136 = vrot.lane.b32.xlu0 %v12, 64
  %v137 = vpop.permute.xlu0 %136
  %vm140 = vcmask 261120
  %v141 = vsel %vm140, %v130, %v135
  %v142 = vsel %vm140, %v131, %v137
  %v143 = vperm.slane %v38, 0
  %vm144 = vcmask 523264
  %v146 = vsel %vm144, %v141, 0
  %v149 = vsel %vm144, %v142, 0
  %151 = vmatpush.msra.mxu0 0.0
  %152 = vmatpush.msra.mxu0 0.0
  %153 = vmatpush.msra.mxu0 0.0
  %154 = vmatpush.msra.mxu0 0.0
  %155 = vmatpush.msra.mxu0 0.0
  %156 = vmatpush.msra.mxu0 0.0
  %157 = vmatpush.msra.mxu0 0.0
  %158 = vmatpush.msra.mxu0 0.0
  %159 = vmatpush.msra.mxu0 %v36
  %160 = vmatpush.msra.mxu0 %v35
  %161 = vmatpush.msra.mxu0 %v34
  %162 = vmatpush.msra.mxu0 %v33
  %163 = vmatpush.msra.mxu0 %v32
  %164 = vmatpush.msra.mxu0 %v31
  %165 = vmatpush.msra.mxu0 %v30
  %166 = vmatpush.msra.mxu0 %v29
  %167 = vmatmul.f32.gmra.mxu0 %v146
  %v168 = vpop.f32.mrf.mxu0
  %v169 = vadd.f32 %v143, %v168
  %170 = vmatmul.f32.gmra.mxu0 %v149
  %v171 = vpop.f32.mrf.mxu0
  %v172 = vadd.f32 %v143, %v171
  %173 = vdwg.mxu0
  %v174 = vtanh.pop %v169
  %v175 = vtanh.pop %v172
  %v176 = vxor.u32 %v169, 2147483648
  %v177 = vxor.u32 %v172, 2147483648
  %v178 = vmul.f32 %v176, 1.442695
  %v179 = vpow.pop %v178
  %v180 = vmul.f32 %v177, 1.442695
  %v181 = vpow.pop %v180
  %v182 = vadd.f32 %v179, 1.0
  %v183 = vadd.f32 %v181, 1.0
  %v184 = vrcp.pop %v182
  %v185 = vmul.f32 %v182, %v184
  %v186 = vsub.f32 1.0, %v185
  %v187 = vmul.f32 %v184, %v186
  %v188 = vadd.f32 %v184, %v187
  %vm189 = vweird.f32 %v182
  %vm190 = vweird.f32 %v184
  %vm191 = vmor %vm189, %vm190
  %v192 = vsel %vm191, %v184, %v188
  %v193 = vand.u32 2147483647, %v182
  %vm194 = vcmp.eq.f32.partialorder %v193, 8.507059e+37
  %v195 = vand.u32 %v182, 2147483648
  %v196 = vor.u32 1.1754944e-38, %v195
  %v197 = vsel %vm194, %v196, %v192
  %v198 = vmul.f32 1.0, %v197
  %v199 = vrcp.pop %v183
  %v200 = vmul.f32 %v183, %v199
  %v201 = vsub.f32 1.0, %v200
  %v202 = vmul.f32 %v199, %v201
  %v203 = vadd.f32 %v199, %v202
  %vm204 = vweird.f32 %v183
  %vm205 = vweird.f32 %v199
  %vm206 = vmor %vm204, %vm205
  %v207 = vsel %vm206, %v199, %v203
  %v208 = vand.u32 2147483647, %v183
  %vm209 = vcmp.eq.f32.partialorder %v208, 8.507059e+37
  %v210 = vand.u32 %v183, 2147483648
  %v211 = vor.u32 1.1754944e-38, %v210
  %v212 = vsel %vm209, %v211, %v207
  %v213 = vmul.f32 1.0, %v212
  %216 = vrot.lane.b32.xlu0 %v198, 96
  %v217 = vpop.permute.xlu0 %216
  %218 = vrot.lane.b32.xlu0 %v213, 96
  %v219 = vpop.permute.xlu0 %218
  %v222 = vmul.f32 %v174, %v217
  %v223 = vmul.f32 %v175, %v219
  %226 = vrot.lane.b32.xlu0 %v222, 64
  %v227 = vpop.permute.xlu0 %226
  %228 = vrot.lane.b32.xlu0 %v223, 64
  %v229 = vpop.permute.xlu0 %228
  %v232 = vsel %vm120, %v222, %v227
  %v233 = vsel %vm121, %v223, %v229
  %234 = vst.msk [vmem:[%s2] sm:$0xff] %vm140, %v232
  %235 = vst.msk [vmem:[%s2 + $0x8] sm:$0xff] %vm140, %v233
  // Predicated region
  $region10: #{_decompose_step.1} parent=0 // pred_check
    _
  $region11: #{_decompose_step.1} parent=0 // pred_check_branch
    %237 = sbr.rel (0) target = $region13
  $region12: #{_decompose_step.1} parent=0 // pred_region
    _
  $region13: #{_decompose_step.1} parent=0 // pred_fallthru
    _
  // Predicated region
  $region14: #{_decompose_step.1} parent=0 // pred_check
    _
  $region15: #{_decompose_step.1} parent=0 // pred_check_branch
    %239 = sbr.rel (0) target = $region17
  $region16: #{_decompose_step.1} parent=0 // pred_region
    _
  $region17: #{_decompose_step.1} parent=0 // pred_fallthru
    _

</llo_original>
